<compile_context>
chip_gen: v6e
topology: v6e:2x2x1
jax: 0.10.0
libtpu: 0.0.40
codegen_flags: <defaults>
</compile_context>

<pallas_src>
import functools

import jax
import jax.numpy as jnp
from jax.experimental import pallas as pl
from jax.experimental.pallas import tpu as pltpu

HIDDEN1 = 128
HIDDEN2 = 64
LANE = 128  # padded lane width for the narrow layers / output


def _round_up(a, m):
    return ((a + m - 1) // m) * m


def posenn_kernel(x_ref, w1_ref, b1_ref, w2_ref, b2_ref, w3_ref, b3_ref, o_ref):
    # x arrives as f32; cast to bf16 on the VPU (free -- kernel is DMA-bound).
    x_bf = x_ref[...].astype(jnp.bfloat16)
    # fc1 + ReLU   (bf16 x bf16 -> f32 accumulate)
    h1 = jnp.dot(x_bf, w1_ref[...], preferred_element_type=jnp.float32)
    h1 = jnp.maximum(h1 + b1_ref[...], 0.0)
    # dropout(p=0.3): identity at inference
    # fc2 + ReLU   (padded lane dim 64 -> 128; padded columns stay exactly 0)
    h2 = jnp.dot(h1.astype(jnp.bfloat16), w2_ref[...],
                 preferred_element_type=jnp.float32)
    h2 = jnp.maximum(h2 + b2_ref[...], 0.0)
    # dropout(p=0.3): identity at inference
    # fc3 (no activation), output lane-padded to 128
    out = jnp.dot(h2.astype(jnp.bfloat16), w3_ref[...],
                  preferred_element_type=jnp.float32)
    o_ref[...] = (out + b3_ref[...]).astype(o_ref.dtype)


def pack_params(params, num_classes):
    """Cast weights to bf16 and zero-pad narrow lane dims to LANE (=128)."""
    assert num_classes <= LANE, "num_classes must be <= 128 for the padded layout"
    w1 = params["w1"].astype(jnp.bfloat16)                       # [in, 128]
    b1 = params["b1"].astype(jnp.float32)                        # [1, 128]
    w2 = jnp.pad(params["w2"], ((0, 0), (0, LANE - HIDDEN2))).astype(jnp.bfloat16)
    b2 = jnp.pad(params["b2"], ((0, 0), (0, LANE - HIDDEN2))).astype(jnp.float32)
    w3 = jnp.pad(params["w3"],
                 ((0, LANE - HIDDEN2), (0, LANE - num_classes))).astype(jnp.bfloat16)
    b3 = jnp.pad(params["b3"], ((0, 0), (0, LANE - num_classes))).astype(jnp.float32)
    return w1, b1, w2, b2, w3, b3


@functools.partial(jax.jit, static_argnames=("num_classes",))
def posenn_forward(x, params, *, num_classes):
    """x: [B, input_size] float32.  params: dict of f32 weights ([in, out]) / biases."""
    B, input_size = x.shape
    w1, b1, w2, b2, w3, b3 = pack_params(params, num_classes)

    # Batch tiling: big tiles (2048-row cap fits <8 MiB VMEM incl. double
    # buffers), tiny-but-sublane-aligned tiles for small batches.  Ragged last
    # block is handled by Pallas (padded read, masked write) -- no jnp.pad.
    tile_b = min(2048, _round_up(B, 8))
    if B > 1024:
        # Keep >= 2 grid steps so "parallel" can split the batch across
        # TensorCores on megacore parts (v7x).
        tile_b = min(tile_b, _round_up(pl.cdiv(B, 2), 8))
    grid = (pl.cdiv(B, tile_b),)

    resident = lambda shape: pl.BlockSpec(shape, lambda i: (0,) * len(shape))

    flops = 2 * B * (input_size * HIDDEN1 + HIDDEN1 * LANE + LANE * LANE)
    bytes_accessed = (x.size * 4 + B * LANE * 4
                      + w1.size * 2 + w2.size * 2 + w3.size * 2
                      + (b1.size + b2.size + b3.size) * 4)

    out = pl.pallas_call(
        posenn_kernel,
        out_shape=jax.ShapeDtypeStruct((B, LANE), jnp.float32),
        grid=grid,
        in_specs=[
            pl.BlockSpec((tile_b, input_size), lambda i: (i, 0)),   # x: pipelined (f32)
            resident(w1.shape), resident(b1.shape),                 # weights: VMEM-resident
            resident(w2.shape), resident(b2.shape),
            resident(w3.shape), resident(b3.shape),
        ],
        out_specs=pl.BlockSpec((tile_b, LANE), lambda i: (i, 0)),
        compiler_params=pltpu.CompilerParams(
            dimension_semantics=("parallel",),
            vmem_limit_bytes=32 * 1024 * 1024),
        cost_estimate=pl.CostEstimate(flops=flops, transcendentals=0,
                                      bytes_accessed=bytes_accessed),
    )(x, w1, b1, w2, b2, w3, b3)

    # Drop the zero-padded logit lanes.  (Padded batch rows, if any, were
    # masked out by the ragged-block write.)
    return out[:, :num_classes]


def init_params(key, input_size, num_classes):
    """Mimics nn.Linear's uniform(-1/sqrt(fan_in), 1/sqrt(fan_in)) init.

    Weights are stored [in, out] (transposed relative to PyTorch) so the
    kernel computes x @ W + b."""
    ks = jax.random.split(key, 6)

    def linear(kw, kb, fan_in, fan_out):
        bound = 1.0 / jnp.sqrt(jnp.float32(fan_in))
        w = jax.random.uniform(kw, (fan_in, fan_out), jnp.float32, -bound, bound)
        b = jax.random.uniform(kb, (1, fan_out), jnp.float32, -bound, bound)
        return w, b

    w1, b1 = linear(ks[0], ks[1], input_size, HIDDEN1)
    w2, b2 = linear(ks[2], ks[3], HIDDEN1, HIDDEN2)
    w3, b3 = linear(ks[4], ks[5], HIDDEN2, num_classes)
    return {"w1": w1, "b1": b1, "w2": w2, "b2": b2, "w3": w3, "b3": b3}


def posenn_reference_f32(x, params):
    h1 = jnp.maximum(x @ params["w1"] + params["b1"], 0.0)
    h2 = jnp.maximum(h1 @ params["w2"] + params["b2"], 0.0)
    return h2 @ params["w3"] + params["b3"]


def posenn_reference_bf16(x, params):
    """Reference that mirrors the kernel's bf16-input / f32-accumulate math."""
    bf = jnp.bfloat16
    h1 = jnp.dot(x.astype(bf), params["w1"].astype(bf),
                 preferred_element_type=jnp.float32) + params["b1"]
    h1 = jnp.maximum(h1, 0.0)
    h2 = jnp.dot(h1.astype(bf), params["w2"].astype(bf),
                 preferred_element_type=jnp.float32) + params["b2"]
    h2 = jnp.maximum(h2, 0.0)
    return jnp.dot(h2.astype(bf), params["w3"].astype(bf),
                   preferred_element_type=jnp.float32) + params["b3"]


if __name__ == "__main__":
    key = jax.random.PRNGKey(0)
    k_x, k_p = jax.random.split(key)

    batch = 8
    input_size = 32      # e.g. flattened pose keypoints
    num_classes = 10

    x = jax.random.normal(k_x, (batch, input_size), jnp.float32)
    params = init_params(k_p, input_size, num_classes)

    out = posenn_forward(x, params, num_classes=num_classes)
    out = jax.block_until_ready(out)
    assert out.shape == (batch, num_classes)

    # Tight check against a reference that matches the kernel's bf16 math.
    ref_bf16 = posenn_reference_bf16(x, params)
    assert jnp.allclose(out, ref_bf16, atol=1e-3, rtol=1e-3), (
        jnp.max(jnp.abs(out - ref_bf16)))

    # Loose sanity check against the pure-f32 reference (bf16 matmuls cost ~1e-3 rel).
    ref_f32 = posenn_reference_f32(x, params)
    assert jnp.allclose(out, ref_f32, atol=5e-2, rtol=5e-2), (
        jnp.max(jnp.abs(out - ref_f32)))

    # Ragged-batch path (B not a multiple of the tile): exercises Pallas's
    # padded-read / masked-write handling of the final block.
    x_rag = jax.random.normal(k_x, (5, input_size), jnp.float32)
    out_rag = jax.block_until_ready(
        posenn_forward(x_rag, params, num_classes=num_classes))
    ref_rag = posenn_reference_bf16(x_rag, params)
    assert out_rag.shape == (5, num_classes)
    assert jnp.allclose(out_rag, ref_rag, atol=1e-3, rtol=1e-3), (
        jnp.max(jnp.abs(out_rag - ref_rag)))

    print("KERNEL_OK")
</pallas_src>

<mosaic_0001>
module attributes {stable_mosaic.version = 11 : i64} {
  func.func @posenn_kernel(%arg0: i32, %arg1: memref<8x32xf32, #tpu.memory_space<vmem>>, %arg2: memref<32x128xbf16, #tpu.memory_space<vmem>>, %arg3: memref<1x128xf32, #tpu.memory_space<vmem>>, %arg4: memref<128x128xbf16, #tpu.memory_space<vmem>>, %arg5: memref<1x128xf32, #tpu.memory_space<vmem>>, %arg6: memref<128x128xbf16, #tpu.memory_space<vmem>>, %arg7: memref<1x128xf32, #tpu.memory_space<vmem>>, %arg8: memref<8x128xf32, #tpu.memory_space<vmem>>) attributes {dimension_semantics = [#tpu.dimension_semantics<parallel>], iteration_bounds = array<i64: 1>, scalar_prefetch = 0 : i64, scratch_operands = 0 : i64, tpu.core_type = #tpu.core_type<tc>, window_params = [{transform_indices = @transform_0, window_bounds = array<i64: 8, 32>}, {pipeline_mode = #tpu.pipeline_mode<synchronous>, transform_indices = @transform_1, window_bounds = array<i64: 32, 128>}, {pipeline_mode = #tpu.pipeline_mode<synchronous>, transform_indices = @transform_2, window_bounds = array<i64: 1, 128>}, {pipeline_mode = #tpu.pipeline_mode<synchronous>, transform_indices = @transform_3, window_bounds = array<i64: 128, 128>}, {pipeline_mode = #tpu.pipeline_mode<synchronous>, transform_indices = @transform_4, window_bounds = array<i64: 1, 128>}, {pipeline_mode = #tpu.pipeline_mode<synchronous>, transform_indices = @transform_5, window_bounds = array<i64: 128, 128>}, {pipeline_mode = #tpu.pipeline_mode<synchronous>, transform_indices = @transform_6, window_bounds = array<i64: 1, 128>}, {transform_indices = @transform_7, window_bounds = array<i64: 8, 128>}]} {
    %c0 = arith.constant 0 : index
    %c0_0 = arith.constant 0 : index
    %0 = vector.load %arg1[%c0, %c0_0] : memref<8x32xf32, #tpu.memory_space<vmem>>, vector<8x32xf32>
    %1 = arith.truncf %0 : vector<8x32xf32> to vector<8x32xbf16>
    %c0_1 = arith.constant 0 : index
    %c0_2 = arith.constant 0 : index
    %2 = vector.load %arg2[%c0_1, %c0_2] : memref<32x128xbf16, #tpu.memory_space<vmem>>, vector<32x128xbf16>
    %cst = arith.constant dense<0.000000e+00> : vector<8x128xf32>
    %3 = tpu.matmul %1, %2, %cst {dimension_numbers = #tpu.dot_dimension_numbers<[1], [0], [0], [1], [0, 0, 1, 1], [], []>} : vector<8x32xbf16>, vector<32x128xbf16>, vector<8x128xf32> -> vector<8x128xf32>
    %c0_3 = arith.constant 0 : index
    %c0_4 = arith.constant 0 : index
    %4 = vector.load %arg3[%c0_3, %c0_4] : memref<1x128xf32, #tpu.memory_space<vmem>>, vector<1x128xf32>
    %5 = vector.broadcast %4 : vector<1x128xf32> to vector<8x128xf32>
    %6 = arith.addf %3, %5 : vector<8x128xf32>
    %cst_5 = arith.constant 0.000000e+00 : f32
    %7 = vector.broadcast %cst_5 : f32 to vector<8x128xf32>
    %8 = arith.maximumf %6, %7 : vector<8x128xf32>
    %9 = arith.truncf %8 : vector<8x128xf32> to vector<8x128xbf16>
    %c0_6 = arith.constant 0 : index
    %c0_7 = arith.constant 0 : index
    %10 = vector.load %arg4[%c0_6, %c0_7] : memref<128x128xbf16, #tpu.memory_space<vmem>>, vector<128x128xbf16>
    %cst_8 = arith.constant dense<0.000000e+00> : vector<8x128xf32>
    %11 = tpu.matmul %9, %10, %cst_8 {dimension_numbers = #tpu.dot_dimension_numbers<[1], [0], [0], [1], [0, 0, 1, 1], [], []>} : vector<8x128xbf16>, vector<128x128xbf16>, vector<8x128xf32> -> vector<8x128xf32>
    %c0_9 = arith.constant 0 : index
    %c0_10 = arith.constant 0 : index
    %12 = vector.load %arg5[%c0_9, %c0_10] : memref<1x128xf32, #tpu.memory_space<vmem>>, vector<1x128xf32>
    %13 = vector.broadcast %12 : vector<1x128xf32> to vector<8x128xf32>
    %14 = arith.addf %11, %13 : vector<8x128xf32>
    %cst_11 = arith.constant 0.000000e+00 : f32
    %15 = vector.broadcast %cst_11 : f32 to vector<8x128xf32>
    %16 = arith.maximumf %14, %15 : vector<8x128xf32>
    %17 = arith.truncf %16 : vector<8x128xf32> to vector<8x128xbf16>
    %c0_12 = arith.constant 0 : index
    %c0_13 = arith.constant 0 : index
    %18 = vector.load %arg6[%c0_12, %c0_13] : memref<128x128xbf16, #tpu.memory_space<vmem>>, vector<128x128xbf16>
    %cst_14 = arith.constant dense<0.000000e+00> : vector<8x128xf32>
    %19 = tpu.matmul %17, %18, %cst_14 {dimension_numbers = #tpu.dot_dimension_numbers<[1], [0], [0], [1], [0, 0, 1, 1], [], []>} : vector<8x128xbf16>, vector<128x128xbf16>, vector<8x128xf32> -> vector<8x128xf32>
    %c0_15 = arith.constant 0 : index
    %c0_16 = arith.constant 0 : index
    %20 = vector.load %arg7[%c0_15, %c0_16] : memref<1x128xf32, #tpu.memory_space<vmem>>, vector<1x128xf32>
    %21 = vector.broadcast %20 : vector<1x128xf32> to vector<8x128xf32>
    %22 = arith.addf %19, %21 : vector<8x128xf32>
    %c0_17 = arith.constant 0 : index
    %c0_18 = arith.constant 0 : index
    %23 = vector.load %arg8[%c0_17, %c0_18] : memref<8x128xf32, #tpu.memory_space<vmem>>, vector<8x128xf32>
    tpu.vector_store %arg8[%c0_17, %c0_18], %22 {strides = array<i32>} : memref<8x128xf32, #tpu.memory_space<vmem>>, vector<8x128xf32>,
    return
  }
  func.func @transform_0(%arg0: i32) -> (i32, i32) {
    %c0_i32 = arith.constant 0 : i32
    %c0_i32_0 = arith.constant 0 : i32
    return %arg0, %c0_i32 : i32, i32
  }
  func.func @transform_1(%arg0: i32) -> (i32, i32) {
    %c0_i32 = arith.constant 0 : i32
    %c0_i32_0 = arith.constant 0 : i32
    %c0_i32_1 = arith.constant 0 : i32
    return %c0_i32, %c0_i32_0 : i32, i32
  }
  func.func @transform_2(%arg0: i32) -> (i32, i32) {
    %c0_i32 = arith.constant 0 : i32
    %c0_i32_0 = arith.constant 0 : i32
    %c0_i32_1 = arith.constant 0 : i32
    return %c0_i32, %c0_i32_0 : i32, i32
  }
  func.func @transform_3(%arg0: i32) -> (i32, i32) {
    %c0_i32 = arith.constant 0 : i32
    %c0_i32_0 = arith.constant 0 : i32
    %c0_i32_1 = arith.constant 0 : i32
    return %c0_i32, %c0_i32_0 : i32, i32
  }
  func.func @transform_4(%arg0: i32) -> (i32, i32) {
    %c0_i32 = arith.constant 0 : i32
    %c0_i32_0 = arith.constant 0 : i32
    %c0_i32_1 = arith.constant 0 : i32
    return %c0_i32, %c0_i32_0 : i32, i32
  }
  func.func @transform_5(%arg0: i32) -> (i32, i32) {
    %c0_i32 = arith.constant 0 : i32
    %c0_i32_0 = arith.constant 0 : i32
    %c0_i32_1 = arith.constant 0 : i32
    return %c0_i32, %c0_i32_0 : i32, i32
  }
  func.func @transform_6(%arg0: i32) -> (i32, i32) {
    %c0_i32 = arith.constant 0 : i32
    %c0_i32_0 = arith.constant 0 : i32
    %c0_i32_1 = arith.constant 0 : i32
    return %c0_i32, %c0_i32_0 : i32, i32
  }
  func.func @transform_7(%arg0: i32) -> (i32, i32) {
    %c0_i32 = arith.constant 0 : i32
    %c0_i32_0 = arith.constant 0 : i32
    return %arg0, %c0_i32 : i32, i32
  }
}

</mosaic_0001>

<llo_original>
// kernel: posenn_forward.1
$region0: #{posenn_forward.1}
  #allocation0 [shape = 'u32[]', space=smem, size = 0x4, offset = 0x4, fixed_abs, tag = 'smem constant byte address 0x4 - core index']
  #allocation1 [shape = 'u32[144,128]{1,0:T(1,128)}', space=vmem, size = 0x12000, scoped, tag = 'internal scratch']
  %s0 = inlined_call_operand.vmem [shape: f32[8,32], index: 0, kind: input, shape index: {}]
  %s1 = inlined_call_operand.vmem [shape: bf16[32,128], index: 1, kind: input, shape index: {}]
  %s2 = inlined_call_operand.vmem [shape: f32[1,128], index: 2, kind: input, shape index: {}]
  %s3 = inlined_call_operand.vmem [shape: bf16[128,128], index: 3, kind: input, shape index: {}]
  %s4 = inlined_call_operand.vmem [shape: f32[1,128], index: 4, kind: input, shape index: {}]
  %s5 = inlined_call_operand.vmem [shape: bf16[128,128], index: 5, kind: input, shape index: {}]
  %s6 = inlined_call_operand.vmem [shape: f32[1,128], index: 6, kind: input, shape index: {}]
  %s7 = inlined_call_operand.hbm [shape: f32[8,128], index: 7, kind: output, shape index: {}]
  %s8 = sld [smem:[#allocation0]]
  $region38: #{posenn_forward.1} parent=0
    _
  %s10 = ssub.s32 1, %s8
  %s11 = scalar_select 0, %s10, %s8
  $region1: #{posenn_forward.1} parent=0
    #allocation2 [shape = 'u8[4096]{0}', space=vmem, size = 0x1000, scoped, tag = 'output window, operand 0, single buffered']
    #allocation3 [shape = 's32[1]{0}', space=sflag, size = 0x4, scoped, tag = 'scoped memory for posenn_forward.1']
    %12 = vsyncpa [#allocation3], 0
    // Predicated region
    $region2: #{posenn_forward.1} parent=1 // pred_check
      _
    $region3: #{posenn_forward.1} parent=1 // pred_check_branch
      %14 = sbr.rel (0) target = $region5
    $region4: #{posenn_forward.1} parent=1 // pred_region
      _
    $region5: #{posenn_forward.1} parent=1 // pred_fallthru
      _
    // Predicated region
    $region6: #{posenn_forward.1} parent=1 // pred_check
      _
    $region7: #{posenn_forward.1} parent=1 // pred_check_branch
      %16 = sbr.rel (0) target = $region9
    $region8: #{posenn_forward.1} parent=1 // pred_region
      _
    $region9: #{posenn_forward.1} parent=1 // pred_fallthru
      _
    // Predicated region
    $region10: #{posenn_forward.1} parent=1 // pred_check
      _
    $region11: #{posenn_forward.1} parent=1 // pred_check_branch
      %18 = sbr.rel (0) target = $region13
    $region12: #{posenn_forward.1} parent=1 // pred_region
      _
    $region13: #{posenn_forward.1} parent=1 // pred_fallthru
      _
    // Predicated region
    $region14: #{posenn_forward.1} parent=1 // pred_check
      _
    $region15: #{posenn_forward.1} parent=1 // pred_check_branch
      %20 = sbr.rel (0) target = $region17
    $region16: #{posenn_forward.1} parent=1 // pred_region
      _
    $region17: #{posenn_forward.1} parent=1 // pred_fallthru
      _
    // Predicated region
    $region18: #{posenn_forward.1} parent=1 // pred_check
      _
    $region19: #{posenn_forward.1} parent=1 // pred_check_branch
      %22 = sbr.rel (0) target = $region21
    $region20: #{posenn_forward.1} parent=1 // pred_region
      _
    $region21: #{posenn_forward.1} parent=1 // pred_fallthru
      _
    // Predicated region
    $region22: #{posenn_forward.1} parent=1 // pred_check
      _
    $region23: #{posenn_forward.1} parent=1 // pred_check_branch
      %24 = sbr.rel (0) target = $region25
    $region24: #{posenn_forward.1} parent=1 // pred_region
      _
    $region25: #{posenn_forward.1} parent=1 // pred_fallthru
      _
    // Predicated region
    $region26: #{posenn_forward.1} parent=1 // pred_check
      _
    $region27: #{posenn_forward.1} parent=1 // pred_check_branch
      %26 = sbr.rel (0) target = $region29
    $region28: #{posenn_forward.1} parent=1 // pred_region
      _
    $region29: #{posenn_forward.1} parent=1 // pred_fallthru
      _
    %v28 = vld [vmem:[%s0] sm:$0xff]
    %v29 = vpack.c.bf16 %v28, %v28
    %v30 = vld [vmem:[%s1] sm:$0xf]
    %v31 = vld [vmem:[%s1 + $0x4] sm:$0xf]
    %v32 = vld [vmem:[%s1 + $0x8] sm:$0xf]
    %v33 = vld [vmem:[%s1 + $0xc] sm:$0xf]
    %v34 = vld [vmem:[%s2] sm:$0x1]
    %v36 = vlaneseq
    %v37 = vshrl.u32 %v36, 7
    %v38 = vsub.s32 0, %v37
    %v39 = vrot.slane %v34, %v38
    %v45 = vunpack.c.l.b16 %v30
    %v46 = vunpack.c.l.b16 %v31
    %v47 = vunpack.c.l.b16 %v32
    %v48 = vunpack.c.l.b16 %v33
    %v49 = vpack.c.b16 %v46, %v45
    %v50 = vpack.c.b16 %v48, %v47
    %vm53 = vcmask 261120
    %v55 = vsel %vm53, %v29, 0
    %57 = vmatprep.subr.bf16.mxu0 0
    %58 = vmatpush1.bf16.msra.mxu0 0
    %59 = vmatprep.subr.bf16.mxu0 0
    %60 = vmatpush1.bf16.msra.mxu0 0
    %61 = vmatprep.subr.bf16.mxu0 0
    %62 = vmatpush1.bf16.msra.mxu0 0
    %63 = vmatprep.subr.bf16.mxu0 0
    %64 = vmatpush1.bf16.msra.mxu0 0
    %65 = vmatprep.subr.bf16.mxu0 0
    %66 = vmatpush1.bf16.msra.mxu0 0
    %67 = vmatprep.subr.bf16.mxu0 0
    %68 = vmatpush1.bf16.msra.mxu0 0
    %69 = vmatprep.subr.bf16.mxu0 0
    %70 = vmatpush1.bf16.msra.mxu0 %v50
    %71 = vmatprep.subr.bf16.mxu0 0
    %72 = vmatpush1.bf16.msra.mxu0 %v49
    %73 = vmatprep.subr.bf16.mxu0 0
    %74 = vmatpush2.bf16.msra.mxu0 0
    %75 = vmatprep.subr.bf16.mxu0 0
    %76 = vmatpush2.bf16.msra.mxu0 0
    %77 = vmatprep.subr.bf16.mxu0 0
    %78 = vmatpush2.bf16.msra.mxu0 0
    %79 = vmatprep.subr.bf16.mxu0 0
    %80 = vmatpush2.bf16.msra.mxu0 0
    %81 = vmatprep.subr.bf16.mxu0 0
    %82 = vmatpush2.bf16.msra.mxu0 0
    %83 = vmatprep.subr.bf16.mxu0 0
    %84 = vmatpush2.bf16.msra.mxu0 0
    %85 = vmatprep.subr.bf16.mxu0 0
    %86 = vmatpush2.bf16.msra.mxu0 0
    %87 = vmatprep.subr.bf16.mxu0 0
    %88 = vmatpush2.bf16.msra.mxu0 0
    %89 = vmatprep.mubr.bf16.mxu0 0
    %90 = vmatmul.mubr.bf16.gmra.mxu0 %v55
    %v91 = vpop.f32.mrf.mxu0
    %v92 = vadd.f32 %v39, %v91
    %v93 = vpop.f32.mrf.mxu0
    %v94 = vpop.f32.mrf.mxu0
    %v95 = vpop.f32.mrf.mxu0
    %96 = vdwg.mxu0
    %v97 = vmax.f32 %v92, 0.0
    %v98 = vpack.c.bf16 %v97, %v97
    %v99 = vld [vmem:[%s3] sm:$0xf]
    %v100 = vld [vmem:[%s3 + $0x4] sm:$0xf]
    %v101 = vld [vmem:[%s3 + $0x8] sm:$0xf]
    %v102 = vld [vmem:[%s3 + $0xc] sm:$0xf]
    %v103 = vld [vmem:[%s3 + $0x10] sm:$0xf]
    %v104 = vld [vmem:[%s3 + $0x14] sm:$0xf]
    %v105 = vld [vmem:[%s3 + $0x18] sm:$0xf]
    %v106 = vld [vmem:[%s3 + $0x1c] sm:$0xf]
    %v107 = vld [vmem:[%s3 + $0x20] sm:$0xf]
    %v108 = vld [vmem:[%s3 + $0x24] sm:$0xf]
    %v109 = vld [vmem:[%s3 + $0x28] sm:$0xf]
    %v110 = vld [vmem:[%s3 + $0x2c] sm:$0xf]
    %v111 = vld [vmem:[%s3 + $0x30] sm:$0xf]
    %v112 = vld [vmem:[%s3 + $0x34] sm:$0xf]
    %v113 = vld [vmem:[%s3 + $0x38] sm:$0xf]
    %v114 = vld [vmem:[%s3 + $0x3c] sm:$0xf]
    %v115 = vld [vmem:[%s4] sm:$0x1]
    %v117 = vlaneseq
    %v118 = vshrl.u32 %v117, 7
    %v119 = vsub.s32 0, %v118
    %v120 = vrot.slane %v115, %v119
    %v138 = vunpack.c.l.b16 %v99
    %v139 = vunpack.c.l.b16 %v100
    %v140 = vunpack.c.l.b16 %v101
    %v141 = vunpack.c.l.b16 %v102
    %v142 = vunpack.c.l.b16 %v103
    %v143 = vunpack.c.l.b16 %v104
    %v144 = vunpack.c.l.b16 %v105
    %v145 = vunpack.c.l.b16 %v106
    %v146 = vunpack.c.l.b16 %v107
    %v147 = vunpack.c.l.b16 %v108
    %v148 = vunpack.c.l.b16 %v109
    %v149 = vunpack.c.l.b16 %v110
    %v150 = vunpack.c.l.b16 %v111
    %v151 = vunpack.c.l.b16 %v112
    %v152 = vunpack.c.l.b16 %v113
    %v153 = vunpack.c.l.b16 %v114
    %v154 = vpack.c.b16 %v139, %v138
    %v155 = vpack.c.b16 %v141, %v140
    %v156 = vpack.c.b16 %v143, %v142
    %v157 = vpack.c.b16 %v145, %v144
    %v158 = vpack.c.b16 %v147, %v146
    %v159 = vpack.c.b16 %v149, %v148
    %v160 = vpack.c.b16 %v151, %v150
    %v161 = vpack.c.b16 %v153, %v152
    %170 = vmatprep.subr.bf16.mxu0 0
    %171 = vmatpush1.bf16.msra.mxu0 %v161
    %172 = vmatprep.subr.bf16.mxu0 0
    %173 = vmatpush1.bf16.msra.mxu0 %v160
    %174 = vmatprep.subr.bf16.mxu0 0
    %175 = vmatpush1.bf16.msra.mxu0 %v159
    %176 = vmatprep.subr.bf16.mxu0 0
    %177 = vmatpush1.bf16.msra.mxu0 %v158
    %178 = vmatprep.subr.bf16.mxu0 0
    %179 = vmatpush1.bf16.msra.mxu0 %v157
    %180 = vmatprep.subr.bf16.mxu0 0
    %181 = vmatpush1.bf16.msra.mxu0 %v156
    %182 = vmatprep.subr.bf16.mxu0 0
    %183 = vmatpush1.bf16.msra.mxu0 %v155
    %184 = vmatprep.subr.bf16.mxu0 0
    %185 = vmatpush1.bf16.msra.mxu0 %v154
    %186 = vmatprep.subr.bf16.mxu0 0
    %187 = vmatpush2.bf16.msra.mxu0 0
    %188 = vmatprep.subr.bf16.mxu0 0
    %189 = vmatpush2.bf16.msra.mxu0 0
    %190 = vmatprep.subr.bf16.mxu0 0
    %191 = vmatpush2.bf16.msra.mxu0 0
    %192 = vmatprep.subr.bf16.mxu0 0
    %193 = vmatpush2.bf16.msra.mxu0 0
    %194 = vmatprep.subr.bf16.mxu0 0
    %195 = vmatpush2.bf16.msra.mxu0 0
    %196 = vmatprep.subr.bf16.mxu0 0
    %197 = vmatpush2.bf16.msra.mxu0 0
    %198 = vmatprep.subr.bf16.mxu0 0
    %199 = vmatpush2.bf16.msra.mxu0 0
    %200 = vmatprep.subr.bf16.mxu0 0
    %201 = vmatpush2.bf16.msra.mxu0 0
    %202 = vmatprep.mubr.bf16.mxu0 0
    %203 = vmatmul.mubr.bf16.gmra.mxu0 %v98
    %v204 = vpop.f32.mrf.mxu0
    %v205 = vadd.f32 %v120, %v204
    %v206 = vpop.f32.mrf.mxu0
    %v207 = vpop.f32.mrf.mxu0
    %v208 = vpop.f32.mrf.mxu0
    %209 = vdwg.mxu0
    %v210 = vmax.f32 %v205, 0.0
    %v211 = vpack.c.bf16 %v210, %v210
    %v212 = vld [vmem:[%s5] sm:$0xf]
    %v213 = vld [vmem:[%s5 + $0x4] sm:$0xf]
    %v214 = vld [vmem:[%s5 + $0x8] sm:$0xf]
    %v215 = vld [vmem:[%s5 + $0xc] sm:$0xf]
    %v216 = vld [vmem:[%s5 + $0x10] sm:$0xf]
    %v217 = vld [vmem:[%s5 + $0x14] sm:$0xf]
    %v218 = vld [vmem:[%s5 + $0x18] sm:$0xf]
    %v219 = vld [vmem:[%s5 + $0x1c] sm:$0xf]
    %v220 = vld [vmem:[%s5 + $0x20] sm:$0xf]
    %v221 = vld [vmem:[%s5 + $0x24] sm:$0xf]
    %v222 = vld [vmem:[%s5 + $0x28] sm:$0xf]
    %v223 = vld [vmem:[%s5 + $0x2c] sm:$0xf]
    %v224 = vld [vmem:[%s5 + $0x30] sm:$0xf]
    %v225 = vld [vmem:[%s5 + $0x34] sm:$0xf]
    %v226 = vld [vmem:[%s5 + $0x38] sm:$0xf]
    %v227 = vld [vmem:[%s5 + $0x3c] sm:$0xf]
    %v228 = vld [vmem:[%s6] sm:$0x1]
    %v230 = vlaneseq
    %v231 = vshrl.u32 %v230, 7
    %v232 = vsub.s32 0, %v231
    %v233 = vrot.slane %v228, %v232
    %v251 = vunpack.c.l.b16 %v212
    %v252 = vunpack.c.l.b16 %v213
    %v253 = vunpack.c.l.b16 %v214
    %v254 = vunpack.c.l.b16 %v215
    %v255 = vunpack.c.l.b16 %v216
    %v256 = vunpack.c.l.b16 %v217
    %v257 = vunpack.c.l.b16 %v218
    %v258 = vunpack.c.l.b16 %v219
    %v259 = vunpack.c.l.b16 %v220
    %v260 = vunpack.c.l.b16 %v221
    %v261 = vunpack.c.l.b16 %v222
    %v262 = vunpack.c.l.b16 %v223
    %v263 = vunpack.c.l.b16 %v224
    %v264 = vunpack.c.l.b16 %v225
    %v265 = vunpack.c.l.b16 %v226
    %v266 = vunpack.c.l.b16 %v227
    %v267 = vpack.c.b16 %v252, %v251
    %v268 = vpack.c.b16 %v254, %v253
    %v269 = vpack.c.b16 %v256, %v255
    %v270 = vpack.c.b16 %v258, %v257
    %v271 = vpack.c.b16 %v260, %v259
    %v272 = vpack.c.b16 %v262, %v261
    %v273 = vpack.c.b16 %v264, %v263
    %v274 = vpack.c.b16 %v266, %v265
    %283 = vmatprep.subr.bf16.mxu0 0
    %284 = vmatpush1.bf16.msra.mxu0 %v274
    %285 = vmatprep.subr.bf16.mxu0 0
    %286 = vmatpush1.bf16.msra.mxu0 %v273
    %287 = vmatprep.subr.bf16.mxu0 0
    %288 = vmatpush1.bf16.msra.mxu0 %v272
    %289 = vmatprep.subr.bf16.mxu0 0
    %290 = vmatpush1.bf16.msra.mxu0 %v271
    %291 = vmatprep.subr.bf16.mxu0 0
    %292 = vmatpush1.bf16.msra.mxu0 %v270
    %293 = vmatprep.subr.bf16.mxu0 0
    %294 = vmatpush1.bf16.msra.mxu0 %v269
    %295 = vmatprep.subr.bf16.mxu0 0
    %296 = vmatpush1.bf16.msra.mxu0 %v268
    %297 = vmatprep.subr.bf16.mxu0 0
    %298 = vmatpush1.bf16.msra.mxu0 %v267
    %299 = vmatprep.subr.bf16.mxu0 0
    %300 = vmatpush2.bf16.msra.mxu0 0
    %301 = vmatprep.subr.bf16.mxu0 0
    %302 = vmatpush2.bf16.msra.mxu0 0
    %303 = vmatprep.subr.bf16.mxu0 0
    %304 = vmatpush2.bf16.msra.mxu0 0
    %305 = vmatprep.subr.bf16.mxu0 0
    %306 = vmatpush2.bf16.msra.mxu0 0
    %307 = vmatprep.subr.bf16.mxu0 0
    %308 = vmatpush2.bf16.msra.mxu0 0
    %309 = vmatprep.subr.bf16.mxu0 0
    %310 = vmatpush2.bf16.msra.mxu0 0
    %311 = vmatprep.subr.bf16.mxu0 0
    %312 = vmatpush2.bf16.msra.mxu0 0
    %313 = vmatprep.subr.bf16.mxu0 0
    %314 = vmatpush2.bf16.msra.mxu0 0
    %315 = vmatprep.mubr.bf16.mxu0 0
    %316 = vmatmul.mubr.bf16.gmra.mxu0 %v211
    %v317 = vpop.f32.mrf.mxu0
    %v318 = vadd.f32 %v233, %v317
    %v319 = vpop.f32.mrf.mxu0
    %v320 = vpop.f32.mrf.mxu0
    %v321 = vpop.f32.mrf.mxu0
    %322 = vdwg.mxu0
    %323 = vst [vmem:[#allocation2] sm:$0xff] %v318
    // Predicated region
    $region30: #{posenn_forward.1} parent=1 // pred_check
      _
    $region31: #{posenn_forward.1} parent=1 // pred_check_branch
      %325 = sbr.rel (0) target = $region33
    $region32: #{posenn_forward.1} parent=1 // pred_region
      %s327 = ssub.s32 128, 128
      %328 = vsyncadd [#allocation3], %s327
      %s330 = sshll.u32 [#allocation2], 4
      %s331 = int_to_ptr.vmem [resolvable:$true] %s330
      %333 = dma.vmem_to_hbm [thread:$0]  %s331, 128, %s7, [#allocation3]
    $region33: #{posenn_forward.1} parent=1 // pred_fallthru
      _
    // Predicated region
    $region34: #{posenn_forward.1} parent=1 // pred_check
      _
    $region35: #{posenn_forward.1} parent=1 // pred_check_branch
      %335 = sbr.rel (0) target = $region37
    $region36: #{posenn_forward.1} parent=1 // pred_region
      %336 = dma.done [#allocation3], 128
    $region37: #{posenn_forward.1} parent=1 // pred_fallthru
      _
    %337 = vsyncpa [#allocation3], 1

</llo_original>
